<compile_context>
chip_gen: v7x
topology: tpu7x:2x2x1
jax: 0.10.0
libtpu: 0.0.40
codegen_flags: <defaults>
</compile_context>

<pallas_src>
import functools

import jax
import jax.numpy as jnp
from jax.experimental import pallas as pl
from jax.experimental.pallas import tpu as pltpu


_SQRT_2_OVER_PI = 0.7978845608028654  # sqrt(2 / pi)


def _round_up(x, m):
    return (x + m - 1) // m * m


def _cdiv(a, b):
    return (a + b - 1) // b


def _gelu_tanh_f32(h):
    # torch gelu(..., approximate=True):
    #   0.5 * x * (1 + tanh(sqrt(2/pi) * (x + 0.044715 * x^3)))
    c = jnp.float32(_SQRT_2_OVER_PI)
    return 0.5 * h * (1.0 + jnp.tanh(c * (h + jnp.float32(0.044715) * (h * h * h))))


def _clip_mlp_kernel(x_ref, w1_ref, b1_ref, w2_ref, b2_ref, o_ref, acc_ref,
                     *, ti, resident_w):
    # x_ref:  (tm, H)                        token tile
    # w1_ref: (H, I_pad) if resident_w else (H, ti)    fc1 weight
    # b1_ref: (1, I_pad)                     fc1 bias (always resident)
    # w2_ref: (I_pad, H) if resident_w else (ti, H)    fc2 weight
    # b2_ref: (1, H)                         fc2 bias
    # o_ref:  (tm, H)                        output tile
    # acc_ref:(tm, H) f32 scratch, persists across the j (intermediate) axis
    j = pl.program_id(1)

    start = j * ti
    if ti % 128 == 0:
        start = pl.multiple_of(start, 128)

    b1c = b1_ref[:, pl.ds(start, ti)]
    if resident_w:
        w1c = w1_ref[:, pl.ds(start, ti)]
        w2c = w2_ref[pl.ds(start, ti), :]
    else:
        w1c = w1_ref[...]
        w2c = w2_ref[...]

    # fc1 partial for this intermediate chunk (f32 MXU accumulation) + GELU.
    h = jnp.dot(x_ref[...], w1c, preferred_element_type=jnp.float32)
    h = _gelu_tanh_f32(h + b1c.astype(jnp.float32))

    # fc2 partial contribution of this chunk.
    part = jnp.dot(h.astype(w2c.dtype), w2c, preferred_element_type=jnp.float32)

    @pl.when(j == 0)
    def _first():
        acc_ref[...] = part          # direct write: no zero-init store + reload

    @pl.when(j > 0)
    def _accumulate():
        acc_ref[...] += part

    @pl.when(j == pl.num_programs(1) - 1)
    def _finalize():
        out = acc_ref[...] + b2_ref[...].astype(jnp.float32)
        o_ref[...] = out.astype(o_ref.dtype)


def _vmem_budget_bytes():
    try:
        cap = int(pltpu.get_tpu_info().vmem_capacity_bytes)
    except Exception:
        cap = 64 * 1024 * 1024       # conservative fallback (v7x per-core VMEM)
    return (cap * 3) // 4            # leave headroom for compiler scratch


@functools.partial(jax.jit, static_argnames=("tm", "ti", "force_stream"))
def clip_mlp(hidden_states, w1, b1, w2, b2, *, tm=None, ti=None, force_stream=False):
    """hidden_states: (B, S, H); w1: (H, I); b1: (I,); w2: (I, H); b2: (H,)."""
    B, S, H = hidden_states.shape
    I = w1.shape[1]
    M = B * S

    x_size = hidden_states.dtype.itemsize
    out_size = x_size
    w_size = w1.dtype.itemsize

    vmem_budget = _vmem_budget_bytes()

    # ---- intermediate-axis chunking -----------------------------------------
    ti_v = 512 if ti is None else ti
    if I <= ti_v:
        ti_v = I
        I_pad = I
    else:
        ti_v = _round_up(ti_v, 128)
        I_pad = _round_up(I, ti_v)

    # ---- resident vs streamed weights ---------------------------------------
    # Full-weight footprint counted double-buffered (conservative).
    w_resident_bytes = 2 * (2 * H * I_pad + I_pad + H) * w_size
    probe_tm = min(256, _round_up(M, 8))
    probe_ws = (2 * probe_tm * H * (x_size + out_size)   # x + out tiles
                + probe_tm * H * 4                       # f32 accumulator
                + 2 * probe_tm * ti_v * 4)               # intermediate headroom
    resident_w = (not force_stream) and (w_resident_bytes + probe_ws <= vmem_budget)

    # ---- token (row) tile ----------------------------------------------------
    if tm is None:
        # Streamed weights need a much taller token tile to cross the HBM
        # roofline (~2*tm/itemsize flops per weight byte).
        tm_v = 256 if resident_w else 1024
    else:
        tm_v = tm
    tm_v = _round_up(max(tm_v, 8), 8)
    tm_v = min(tm_v, _round_up(M, 8))
    if M >= 256:
        # Keep >= 2 tiles on the parallel i axis (v7x megacore sharding).
        tm_v = min(tm_v, _round_up(_cdiv(M, 2), 8))

    def _footprint(tm_):
        if resident_w:
            wb = w_resident_bytes
        else:
            wb = 2 * (2 * ti_v * H) * w_size + 2 * (I_pad + H) * w_size
        return (wb
                + 2 * tm_ * H * (x_size + out_size)
                + tm_ * H * 4
                + 2 * tm_ * ti_v * 4)

    while _footprint(tm_v) > vmem_budget and tm_v > 8:
        tm_v = max(8, _round_up(tm_v // 2, 8))

    M_pad = _round_up(M, tm_v)

    # ---- pad operands ---------------------------------------------------------
    x2d = hidden_states.reshape(M, H)
    if M_pad != M:
        x2d = jnp.pad(x2d, ((0, M_pad - M), (0, 0)))
    if I_pad != I:
        # Zero-padded intermediate columns/rows contribute exactly 0 to fc2.
        w1 = jnp.pad(w1, ((0, 0), (0, I_pad - I)))
        b1 = jnp.pad(b1, ((0, I_pad - I),))
        w2 = jnp.pad(w2, ((0, I_pad - I), (0, 0)))
    b1_2d = b1.reshape(1, I_pad)
    b2_2d = b2.reshape(1, H)

    n_i = M_pad // tm_v
    n_j = I_pad // ti_v
    grid = (n_i, n_j)

    # ---- specs ----------------------------------------------------------------
    if resident_w:
        # Constant block index => weights DMA'd from HBM exactly once.
        w1_spec = pl.BlockSpec((H, I_pad), lambda i, j: (0, 0))
        w2_spec = pl.BlockSpec((I_pad, H), lambda i, j: (0, 0))
    else:
        w1_spec = pl.BlockSpec((H, ti_v), lambda i, j: (0, j))
        w2_spec = pl.BlockSpec((ti_v, H), lambda i, j: (j, 0))
    in_specs = [
        pl.BlockSpec((tm_v, H), lambda i, j: (i, 0)),    # x tile
        w1_spec,                                         # fc1 weight
        pl.BlockSpec((1, I_pad), lambda i, j: (0, 0)),   # fc1 bias (resident)
        w2_spec,                                         # fc2 weight
        pl.BlockSpec((1, H), lambda i, j: (0, 0)),       # fc2 bias (resident)
    ]
    out_spec = pl.BlockSpec((tm_v, H), lambda i, j: (i, 0))

    # ---- advisory cost (honest about weight re-streaming in fallback) --------
    weight_restream = 1 if resident_w else n_i
    weight_bytes = 2 * H * I_pad * w_size * weight_restream + (I_pad + H) * w_size
    cost = pl.CostEstimate(
        flops=4 * M * H * I,            # two M x H x I matmuls
        transcendentals=M * I,          # one tanh per intermediate element
        bytes_accessed=2 * M * H * x_size + weight_bytes,
    )

    vmem_limit = int(min(vmem_budget, max(2 * _footprint(tm_v), 32 * 1024 * 1024)))

    kernel = functools.partial(_clip_mlp_kernel, ti=ti_v, resident_w=resident_w)

    out2d = pl.pallas_call(
        kernel,
        out_shape=jax.ShapeDtypeStruct((M_pad, H), hidden_states.dtype),
        grid_spec=pltpu.PrefetchScalarGridSpec(
            num_scalar_prefetch=0,
            grid=grid,
            in_specs=in_specs,
            out_specs=out_spec,
            scratch_shapes=[pltpu.VMEM((tm_v, H), jnp.float32)],
        ),
        compiler_params=pltpu.CompilerParams(
            dimension_semantics=("parallel", "arbitrary"),
            vmem_limit_bytes=vmem_limit,
        ),
        cost_estimate=cost,
    )(x2d, w1, b1_2d, w2, b2_2d)

    return out2d[:M].reshape(B, S, H)


def _reference_mlp(hidden_states, w1, b1, w2, b2):
    h = hidden_states.astype(jnp.float32) @ w1.astype(jnp.float32) + b1
    c = jnp.float32(_SQRT_2_OVER_PI)
    h = 0.5 * h * (1.0 + jnp.tanh(c * (h + 0.044715 * h**3)))
    return (h @ w2.astype(jnp.float32) + b2).astype(hidden_states.dtype)


if __name__ == "__main__":
    # Config 1: small CLIP-like sizes (hidden=32, intermediate=128, batch=2, seq=8).
    batch, seq, hidden_size, intermediate_size = 2, 8, 32, 128

    key = jax.random.PRNGKey(0)
    k_x, k_w1, k_b1, k_w2, k_b2 = jax.random.split(key, 5)

    x = jax.random.normal(k_x, (batch, seq, hidden_size), dtype=jnp.float32)
    # "nn.Linear"-style params stored as (in, out) for the kernel.
    w1 = jax.random.normal(k_w1, (hidden_size, intermediate_size), jnp.float32) * 0.02
    b1 = jax.random.normal(k_b1, (intermediate_size,), jnp.float32) * 0.02
    w2 = jax.random.normal(k_w2, (intermediate_size, hidden_size), jnp.float32) * 0.02
    b2 = jax.random.normal(k_b2, (hidden_size,), jnp.float32) * 0.02

    out = jax.block_until_ready(clip_mlp(x, w1, b1, w2, b2))
    ref = _reference_mlp(x, w1, b1, w2, b2)
    assert out.shape == (batch, seq, hidden_size)
    assert jnp.allclose(out, ref, atol=1e-4, rtol=1e-4)

    # Config 2: 2-D grid with row padding (M=100 -> 128) and two intermediate
    # chunks (resident weights, in-kernel pl.ds slicing across j).
    batch2, seq2, hidden2, inter2 = 2, 50, 128, 256
    ks = jax.random.split(jax.random.PRNGKey(1), 5)
    x_b = jax.random.normal(ks[0], (batch2, seq2, hidden2), jnp.float32)
    w1_b = jax.random.normal(ks[1], (hidden2, inter2), jnp.float32) * 0.02
    b1_b = jax.random.normal(ks[2], (inter2,), jnp.float32) * 0.02
    w2_b = jax.random.normal(ks[3], (inter2, hidden2), jnp.float32) * 0.02
    b2_b = jax.random.normal(ks[4], (hidden2,), jnp.float32) * 0.02

    out_b = jax.block_until_ready(clip_mlp(x_b, w1_b, b1_b, w2_b, b2_b, tm=64, ti=128))
    ref_b = _reference_mlp(x_b, w1_b, b1_b, w2_b, b2_b)
    assert out_b.shape == (batch2, seq2, hidden2)
    assert jnp.allclose(out_b, ref_b, atol=1e-4, rtol=1e-4)

    # Config 3: same shapes but force the streamed-weight fallback path so both
    # kernel variants are compile- and correctness-checked on hardware.
    out_c = jax.block_until_ready(
        clip_mlp(x_b, w1_b, b1_b, w2_b, b2_b, tm=64, ti=128, force_stream=True))
    assert jnp.allclose(out_c, ref_b, atol=1e-4, rtol=1e-4)

    print("KERNEL_OK")
</pallas_src>

<mosaic_0001>
module attributes {stable_mosaic.version = 11 : i64} {
  func.func @_clip_mlp_kernel(%arg0: i32, %arg1: i32, %arg2: memref<16x32xf32, #tpu.memory_space<vmem>>, %arg3: memref<32x128xf32, #tpu.memory_space<vmem>>, %arg4: memref<1x128xf32, #tpu.memory_space<vmem>>, %arg5: memref<128x32xf32, #tpu.memory_space<vmem>>, %arg6: memref<1x32xf32, #tpu.memory_space<vmem>>, %arg7: memref<16x32xf32, #tpu.memory_space<vmem>>, %arg8: memref<16x32xf32, #tpu.memory_space<vmem>>) attributes {dimension_semantics = [#tpu.dimension_semantics<parallel>, #tpu.dimension_semantics<arbitrary>], iteration_bounds = array<i64: 1, 1>, scalar_prefetch = 0 : i64, scratch_operands = 1 : i64, tpu.core_type = #tpu.core_type<tc>, window_params = [{transform_indices = @transform_0, window_bounds = array<i64: 16, 32>}, {pipeline_mode = #tpu.pipeline_mode<synchronous>, transform_indices = @transform_1, window_bounds = array<i64: 32, 128>}, {pipeline_mode = #tpu.pipeline_mode<synchronous>, transform_indices = @transform_2, window_bounds = array<i64: 1, 128>}, {pipeline_mode = #tpu.pipeline_mode<synchronous>, transform_indices = @transform_3, window_bounds = array<i64: 128, 32>}, {pipeline_mode = #tpu.pipeline_mode<synchronous>, transform_indices = @transform_4, window_bounds = array<i64: 1, 32>}, {transform_indices = @transform_5, window_bounds = array<i64: 16, 32>}]} {
    %c128_i32 = arith.constant 128 : i32
    %0 = arith.muli %arg1, %c128_i32 : i32
    %1 = tpu.assume_multiple %0, 128 : i32
    %c0 = arith.constant 0 : index
    %2 = arith.index_cast %1 : i32 to index
    %3 = vector.load %arg4[%c0, %2] : memref<1x128xf32, #tpu.memory_space<vmem>>, vector<1x128xf32>
    %c0_0 = arith.constant 0 : index
    %4 = arith.index_cast %1 : i32 to index
    %5 = vector.load %arg3[%c0_0, %4] : memref<32x128xf32, #tpu.memory_space<vmem>>, vector<32x128xf32>
    %6 = arith.index_cast %1 : i32 to index
    %c0_1 = arith.constant 0 : index
    %7 = vector.load %arg5[%6, %c0_1] : memref<128x32xf32, #tpu.memory_space<vmem>>, vector<128x32xf32>
    %c0_2 = arith.constant 0 : index
    %c0_3 = arith.constant 0 : index
    %8 = vector.load %arg2[%c0_2, %c0_3] : memref<16x32xf32, #tpu.memory_space<vmem>>, vector<16x32xf32>
    %cst = arith.constant dense<0.000000e+00> : vector<16x128xf32>
    %9 = tpu.matmul %8, %5, %cst {dimension_numbers = #tpu.dot_dimension_numbers<[1], [0], [0], [1], [0, 0, 1, 1], [], []>} : vector<16x32xf32>, vector<32x128xf32>, vector<16x128xf32> -> vector<16x128xf32>
    %10 = vector.broadcast %3 : vector<1x128xf32> to vector<16x128xf32>
    %11 = arith.addf %9, %10 : vector<16x128xf32>
    %cst_4 = arith.constant 5.000000e-01 : f32
    %12 = vector.broadcast %cst_4 : f32 to vector<16x128xf32>
    %13 = arith.mulf %12, %11 : vector<16x128xf32>
    %14 = arith.mulf %11, %11 : vector<16x128xf32>
    %15 = arith.mulf %14, %11 : vector<16x128xf32>
    %cst_5 = arith.constant 4.471500e-02 : f32
    %16 = vector.broadcast %cst_5 : f32 to vector<16x128xf32>
    %17 = arith.mulf %16, %15 : vector<16x128xf32>
    %18 = arith.addf %11, %17 : vector<16x128xf32>
    %cst_6 = arith.constant 0.797884583 : f32
    %19 = vector.broadcast %cst_6 : f32 to vector<16x128xf32>
    %20 = arith.mulf %19, %18 : vector<16x128xf32>
    %21 = math.tanh %20 : vector<16x128xf32>
    %cst_7 = arith.constant 1.000000e+00 : f32
    %22 = vector.broadcast %cst_7 : f32 to vector<16x128xf32>
    %23 = arith.addf %22, %21 : vector<16x128xf32>
    %24 = arith.mulf %13, %23 : vector<16x128xf32>
    %cst_8 = arith.constant dense<0.000000e+00> : vector<16x32xf32>
    %25 = tpu.matmul %24, %7, %cst_8 {dimension_numbers = #tpu.dot_dimension_numbers<[1], [0], [0], [1], [0, 0, 1, 1], [], []>} : vector<16x128xf32>, vector<128x32xf32>, vector<16x32xf32> -> vector<16x32xf32>
    %c0_i32 = arith.constant 0 : i32
    %26 = arith.cmpi eq, %arg1, %c0_i32 : i32
    %27 = arith.extui %26 : i1 to i32
    %c0_i32_9 = arith.constant 0 : i32
    %28 = arith.cmpi ne, %27, %c0_i32_9 : i32
    scf.if %28 {
      %c0_14 = arith.constant 0 : index
      %c0_15 = arith.constant 0 : index
      %35 = vector.load %arg8[%c0_14, %c0_15] : memref<16x32xf32, #tpu.memory_space<vmem>>, vector<16x32xf32>
      tpu.vector_store %arg8[%c0_14, %c0_15], %25 {strides = array<i32>} : memref<16x32xf32, #tpu.memory_space<vmem>>, vector<16x32xf32>,
    } else {
    }
    %c0_i32_10 = arith.constant 0 : i32
    %29 = arith.cmpi sgt, %arg1, %c0_i32_10 : i32
    %30 = arith.extui %29 : i1 to i32
    %c0_i32_11 = arith.constant 0 : i32
    %31 = arith.cmpi ne, %30, %c0_i32_11 : i32
    scf.if %31 {
      %c0_14 = arith.constant 0 : index
      %c0_15 = arith.constant 0 : index
      %35 = vector.load %arg8[%c0_14, %c0_15] : memref<16x32xf32, #tpu.memory_space<vmem>>, vector<16x32xf32>
      %36 = arith.addf %35, %25 : vector<16x32xf32>
      %c0_16 = arith.constant 0 : index
      %c0_17 = arith.constant 0 : index
      %37 = vector.load %arg8[%c0_16, %c0_17] : memref<16x32xf32, #tpu.memory_space<vmem>>, vector<16x32xf32>
      tpu.vector_store %arg8[%c0_16, %c0_17], %36 {strides = array<i32>} : memref<16x32xf32, #tpu.memory_space<vmem>>, vector<16x32xf32>,
    } else {
    }
    %c0_i32_12 = arith.constant 0 : i32
    %32 = arith.cmpi eq, %arg1, %c0_i32_12 : i32
    %33 = arith.extui %32 : i1 to i32
    %c0_i32_13 = arith.constant 0 : i32
    %34 = arith.cmpi ne, %33, %c0_i32_13 : i32
    scf.if %34 {
      %c0_14 = arith.constant 0 : index
      %c0_15 = arith.constant 0 : index
      %35 = vector.load %arg8[%c0_14, %c0_15] : memref<16x32xf32, #tpu.memory_space<vmem>>, vector<16x32xf32>
      %c0_16 = arith.constant 0 : index
      %c0_17 = arith.constant 0 : index
      %36 = vector.load %arg6[%c0_16, %c0_17] : memref<1x32xf32, #tpu.memory_space<vmem>>, vector<1x32xf32>
      %37 = vector.broadcast %36 : vector<1x32xf32> to vector<16x32xf32>
      %38 = arith.addf %35, %37 : vector<16x32xf32>
      %c0_18 = arith.constant 0 : index
      %c0_19 = arith.constant 0 : index
      %39 = vector.load %arg7[%c0_18, %c0_19] : memref<16x32xf32, #tpu.memory_space<vmem>>, vector<16x32xf32>
      tpu.vector_store %arg7[%c0_18, %c0_19], %38 {strides = array<i32>} : memref<16x32xf32, #tpu.memory_space<vmem>>, vector<16x32xf32>,
    } else {
    }
    return
  }
  func.func @transform_0(%arg0: i32, %arg1: i32) -> (i32, i32) {
    %c0_i32 = arith.constant 0 : i32
    %c0_i32_0 = arith.constant 0 : i32
    return %arg0, %c0_i32 : i32, i32
  }
  func.func @transform_1(%arg0: i32, %arg1: i32) -> (i32, i32) {
    %c0_i32 = arith.constant 0 : i32
    %c0_i32_0 = arith.constant 0 : i32
    %c0_i32_1 = arith.constant 0 : i32
    return %c0_i32, %c0_i32_0 : i32, i32
  }
  func.func @transform_2(%arg0: i32, %arg1: i32) -> (i32, i32) {
    %c0_i32 = arith.constant 0 : i32
    %c0_i32_0 = arith.constant 0 : i32
    %c0_i32_1 = arith.constant 0 : i32
    return %c0_i32, %c0_i32_0 : i32, i32
  }
  func.func @transform_3(%arg0: i32, %arg1: i32) -> (i32, i32) {
    %c0_i32 = arith.constant 0 : i32
    %c0_i32_0 = arith.constant 0 : i32
    %c0_i32_1 = arith.constant 0 : i32
    return %c0_i32, %c0_i32_0 : i32, i32
  }
  func.func @transform_4(%arg0: i32, %arg1: i32) -> (i32, i32) {
    %c0_i32 = arith.constant 0 : i32
    %c0_i32_0 = arith.constant 0 : i32
    %c0_i32_1 = arith.constant 0 : i32
    return %c0_i32, %c0_i32_0 : i32, i32
  }
  func.func @transform_5(%arg0: i32, %arg1: i32) -> (i32, i32) {
    %c0_i32 = arith.constant 0 : i32
    %c0_i32_0 = arith.constant 0 : i32
    return %arg0, %c0_i32 : i32, i32
  }
}

</mosaic_0001>

<llo_original>
// kernel: clip_mlp.1
$region0: #{clip_mlp.1}
  #allocation0 [shape = 'u32[]', space=smem, size = 0x4, offset = 0x4, fixed_abs, tag = 'smem constant byte address 0x4 - core index']
  #allocation1 [shape = 'u32[144,128]{1,0:T(1,128)}', space=vmem, size = 0x12000, scoped, tag = 'internal scratch']
  #allocation2 [shape = 'f32[16,32]{1,0:T(8,128)}', space=vmem, size = 0x2000, scoped, tag = 'scratch operand']
  %s0 = inlined_call_operand.vmem [shape: f32[16,32], index: 0, kind: input, shape index: {}]
  %s1 = inlined_call_operand.vmem [shape: f32[32,128], index: 1, kind: input, shape index: {}]
  %s2 = inlined_call_operand.vmem [shape: f32[1,128], index: 2, kind: input, shape index: {}]
  %s3 = inlined_call_operand.vmem [shape: f32[128,32], index: 3, kind: input, shape index: {}]
  %s4 = inlined_call_operand.vmem [shape: f32[1,32], index: 4, kind: input, shape index: {}]
  %s5 = inlined_call_operand.hbm [shape: f32[16,32], index: 5, kind: output, shape index: {}]
  %s6 = sld [smem:[#allocation0]]
  $region42: #{clip_mlp.1} parent=0
    _
  %s8 = ssub.s32 1, %s6
  %s9 = scalar_select 0, %s8, %s6
  $region1: #{clip_mlp.1} parent=0
    #allocation3 [shape = 'u8[8192]{0}', space=vmem, size = 0x2000, scoped, tag = 'output window, operand 0, single buffered']
    #allocation4 [shape = 's32[1]{0}', space=sflag, size = 0x4, scoped, tag = 'scoped memory for clip_mlp.1']
    %10 = vsyncpa [#allocation4], 0
    // Predicated region
    $region2: #{clip_mlp.1} parent=1 // pred_check
      _
    $region3: #{clip_mlp.1} parent=1 // pred_check_branch
      %12 = sbr.rel (0) target = $region5
    $region4: #{clip_mlp.1} parent=1 // pred_region
      _
    $region5: #{clip_mlp.1} parent=1 // pred_fallthru
      _
    // Predicated region
    $region6: #{clip_mlp.1} parent=1 // pred_check
      _
    $region7: #{clip_mlp.1} parent=1 // pred_check_branch
      %14 = sbr.rel (0) target = $region9
    $region8: #{clip_mlp.1} parent=1 // pred_region
      _
    $region9: #{clip_mlp.1} parent=1 // pred_fallthru
      _
    // Predicated region
    $region10: #{clip_mlp.1} parent=1 // pred_check
      _
    $region11: #{clip_mlp.1} parent=1 // pred_check_branch
      %16 = sbr.rel (0) target = $region13
    $region12: #{clip_mlp.1} parent=1 // pred_region
      _
    $region13: #{clip_mlp.1} parent=1 // pred_fallthru
      _
    // Predicated region
    $region14: #{clip_mlp.1} parent=1 // pred_check
      _
    $region15: #{clip_mlp.1} parent=1 // pred_check_branch
      %18 = sbr.rel (0) target = $region17
    $region16: #{clip_mlp.1} parent=1 // pred_region
      _
    $region17: #{clip_mlp.1} parent=1 // pred_fallthru
      _
    // Predicated region
    $region18: #{clip_mlp.1} parent=1 // pred_check
      _
    $region19: #{clip_mlp.1} parent=1 // pred_check_branch
      %20 = sbr.rel (0) target = $region21
    $region20: #{clip_mlp.1} parent=1 // pred_region
      _
    $region21: #{clip_mlp.1} parent=1 // pred_fallthru
      _
    %s21 = smul.u32 0, 128
    %s22 = sshra.s32 %s21, 7
    %s23 = sand.u32 %s21, 127
    %s24 = scalar_lea.vmem %s2, %s22
    %v25 = vld [vmem:[%s24] sm:$0x1]
    %s26 = scalar_lea.vmem %s1, %s22
    %v27 = vld [vmem:[%s26] sm:$0xff]
    %v28 = vld [vmem:[%s26 + $0x8] sm:$0xff]
    %v29 = vld [vmem:[%s26 + $0x10] sm:$0xff]
    %v30 = vld [vmem:[%s26 + $0x18] sm:$0xff]
    %s31 = scalar_lea.vmem %s3, %s21
    %v32 = vld [vmem:[%s31] sm:$0xff]
    %v33 = vld [vmem:[%s31 + $0x8] sm:$0xff]
    %v34 = vld [vmem:[%s31 + $0x10] sm:$0xff]
    %v35 = vld [vmem:[%s31 + $0x18] sm:$0xff]
    %v36 = vld [vmem:[%s31 + $0x20] sm:$0xff]
    %v37 = vld [vmem:[%s31 + $0x28] sm:$0xff]
    %v38 = vld [vmem:[%s31 + $0x30] sm:$0xff]
    %v39 = vld [vmem:[%s31 + $0x38] sm:$0xff]
    %v40 = vld [vmem:[%s31 + $0x40] sm:$0xff]
    %v41 = vld [vmem:[%s31 + $0x48] sm:$0xff]
    %v42 = vld [vmem:[%s31 + $0x50] sm:$0xff]
    %v43 = vld [vmem:[%s31 + $0x58] sm:$0xff]
    %v44 = vld [vmem:[%s31 + $0x60] sm:$0xff]
    %v45 = vld [vmem:[%s31 + $0x68] sm:$0xff]
    %v46 = vld [vmem:[%s31 + $0x70] sm:$0xff]
    %v47 = vld [vmem:[%s31 + $0x78] sm:$0xff]
    %v48 = vld [vmem:[%s0] sm:$0xff]
    %v49 = vld [vmem:[%s0 + $0x8] sm:$0xff]
    %v51 = vlaneseq
    %v52 = vshrl.u32 %v51, 7
    %v53 = vsub.s32 0, %v52
    %v54 = vrot.slane %v25, %v53
    %vm56 = vcmask 261120
    %v58 = vsel %vm56, %v48, 0
    %v61 = vsel %vm56, %v49, 0
    %63 = vmatprep.subr.mxu0 0.0
    %64 = vmatpush1.msra.mxu0 %v27
    %65 = vmatprep.subr.mxu0 0.0
    %66 = vmatpush1.msra.mxu0 %v28
    %67 = vmatprep.subr.mxu0 0.0
    %68 = vmatpush1.msra.mxu0 %v29
    %69 = vmatprep.subr.mxu0 0.0
    %70 = vmatpush1.msra.mxu0 %v30
    %71 = vmatprep.subr.mxu0 0.0
    %72 = vmatpush1.msra.mxu0 0.0
    %73 = vmatprep.subr.mxu0 0.0
    %74 = vmatpush1.msra.mxu0 0.0
    %75 = vmatprep.subr.mxu0 0.0
    %76 = vmatpush1.msra.mxu0 0.0
    %77 = vmatprep.subr.mxu0 0.0
    %78 = vmatpush1.msra.mxu0 0.0
    %79 = vmatprep.subr.mxu0 0.0
    %80 = vmatpush1.msra.mxu0 0.0
    %81 = vmatprep.subr.mxu0 0.0
    %82 = vmatpush1.msra.mxu0 0.0
    %83 = vmatprep.subr.mxu0 0.0
    %84 = vmatpush1.msra.mxu0 0.0
    %85 = vmatprep.subr.mxu0 0.0
    %86 = vmatpush1.msra.mxu0 0.0
    %87 = vmatprep.subr.mxu0 0.0
    %88 = vmatpush1.msra.mxu0 0.0
    %89 = vmatprep.subr.mxu0 0.0
    %90 = vmatpush1.msra.mxu0 0.0
    %91 = vmatprep.subr.mxu0 0.0
    %92 = vmatpush1.msra.mxu0 0.0
    %93 = vmatprep.subr.mxu0 0.0
    %94 = vmatpush1.msra.mxu0 0.0
    %95 = vmatprep.subr.mxu0 0.0
    %96 = vmatpush1.msra.mxu0 0.0
    %97 = vmatprep.subr.mxu0 0.0
    %98 = vmatpush1.msra.mxu0 0.0
    %99 = vmatprep.subr.mxu0 0.0
    %100 = vmatpush1.msra.mxu0 0.0
    %101 = vmatprep.subr.mxu0 0.0
    %102 = vmatpush1.msra.mxu0 0.0
    %103 = vmatprep.subr.mxu0 0.0
    %104 = vmatpush1.msra.mxu0 0.0
    %105 = vmatprep.subr.mxu0 0.0
    %106 = vmatpush1.msra.mxu0 0.0
    %107 = vmatprep.subr.mxu0 0.0
    %108 = vmatpush1.msra.mxu0 0.0
    %109 = vmatprep.subr.mxu0 0.0
    %110 = vmatpush1.msra.mxu0 0.0
    %111 = vmatprep.subr.mxu0 0.0
    %112 = vmatpush1.msra.mxu0 0.0
    %113 = vmatprep.subr.mxu0 0.0
    %114 = vmatpush1.msra.mxu0 0.0
    %115 = vmatprep.subr.mxu0 0.0
    %116 = vmatpush1.msra.mxu0 0.0
    %117 = vmatprep.subr.mxu0 0.0
    %118 = vmatpush1.msra.mxu0 0.0
    %119 = vmatprep.subr.mxu0 0.0
    %120 = vmatpush1.msra.mxu0 0.0
    %121 = vmatprep.subr.mxu0 0.0
    %122 = vmatpush1.msra.mxu0 0.0
    %123 = vmatprep.subr.mxu0 0.0
    %124 = vmatpush1.msra.mxu0 0.0
    %125 = vmatprep.subr.mxu0 0.0
    %126 = vmatpush1.msra.mxu0 0.0
    %127 = vmatprep.mubr.f32.mxu0 0.0
    %128 = vmatmul.mubr.f32.gmra.mrb[0].mxu0 %v58
    %v129 = vpop.f32.mrb[0].mxu0
    %v130 = vadd.f32 %v54, %v129
    %v131 = vpop.f32.mrb[0].mxu0
    %132 = vmatprep.mubr.f32.mxu0 0.0
    %133 = vmatmul.mubr.f32.gmra.mrb[0].mxu0 %v61
    %v134 = vpop.f32.mrb[0].mxu0
    %v135 = vadd.f32 %v54, %v134
    %v136 = vpop.f32.mrb[0].mxu0
    %137 = vdwg.mxu0
    %v138 = vmul.f32 %v130, 0.5
    %v139 = vmul.f32 %v135, 0.5
    %v140 = vmul.f32 %v130, %v130
    %v141 = vmul.f32 %v135, %v135
    %v142 = vmul.f32 %v140, %v130
    %v143 = vmul.f32 %v141, %v135
    %v144 = vmul.f32 %v142, 0.044715
    %v145 = vmul.f32 %v143, 0.044715
    %v146 = vadd.f32 %v130, %v144
    %v147 = vadd.f32 %v135, %v145
    %v148 = vmul.f32 %v146, 0.7978846
    %v149 = vmul.f32 %v147, 0.7978846
    %v150 = vtanh.pop %v148
    %v151 = vtanh.pop %v149
    %v152 = vadd.f32 %v150, 1.0
    %v153 = vadd.f32 %v151, 1.0
    %v154 = vmul.f32 %v138, %v152
    %v155 = vmul.f32 %v139, %v153
    %156 = vmatprep.subr.mxu0 0.0
    %157 = vmatpush1.msra.mxu0 %v32
    %158 = vmatprep.subr.mxu0 0.0
    %159 = vmatpush1.msra.mxu0 %v33
    %160 = vmatprep.subr.mxu0 0.0
    %161 = vmatpush1.msra.mxu0 %v34
    %162 = vmatprep.subr.mxu0 0.0
    %163 = vmatpush1.msra.mxu0 %v35
    %164 = vmatprep.subr.mxu0 0.0
    %165 = vmatpush1.msra.mxu0 %v36
    %166 = vmatprep.subr.mxu0 0.0
    %167 = vmatpush1.msra.mxu0 %v37
    %168 = vmatprep.subr.mxu0 0.0
    %169 = vmatpush1.msra.mxu0 %v38
    %170 = vmatprep.subr.mxu0 0.0
    %171 = vmatpush1.msra.mxu0 %v39
    %172 = vmatprep.subr.mxu0 0.0
    %173 = vmatpush1.msra.mxu0 %v40
    %174 = vmatprep.subr.mxu0 0.0
    %175 = vmatpush1.msra.mxu0 %v41
    %176 = vmatprep.subr.mxu0 0.0
    %177 = vmatpush1.msra.mxu0 %v42
    %178 = vmatprep.subr.mxu0 0.0
    %179 = vmatpush1.msra.mxu0 %v43
    %180 = vmatprep.subr.mxu0 0.0
    %181 = vmatpush1.msra.mxu0 %v44
    %182 = vmatprep.subr.mxu0 0.0
    %183 = vmatpush1.msra.mxu0 %v45
    %184 = vmatprep.subr.mxu0 0.0
    %185 = vmatpush1.msra.mxu0 %v46
    %186 = vmatprep.subr.mxu0 0.0
    %187 = vmatpush1.msra.mxu0 %v47
    %188 = vmatprep.subr.mxu0 0.0
    %189 = vmatpush1.msra.mxu0 0.0
    %190 = vmatprep.subr.mxu0 0.0
    %191 = vmatpush1.msra.mxu0 0.0
    %192 = vmatprep.subr.mxu0 0.0
    %193 = vmatpush1.msra.mxu0 0.0
    %194 = vmatprep.subr.mxu0 0.0
    %195 = vmatpush1.msra.mxu0 0.0
    %196 = vmatprep.subr.mxu0 0.0
    %197 = vmatpush1.msra.mxu0 0.0
    %198 = vmatprep.subr.mxu0 0.0
    %199 = vmatpush1.msra.mxu0 0.0
    %200 = vmatprep.subr.mxu0 0.0
    %201 = vmatpush1.msra.mxu0 0.0
    %202 = vmatprep.subr.mxu0 0.0
    %203 = vmatpush1.msra.mxu0 0.0
    %204 = vmatprep.subr.mxu0 0.0
    %205 = vmatpush1.msra.mxu0 0.0
    %206 = vmatprep.subr.mxu0 0.0
    %207 = vmatpush1.msra.mxu0 0.0
    %208 = vmatprep.subr.mxu0 0.0
    %209 = vmatpush1.msra.mxu0 0.0
    %210 = vmatprep.subr.mxu0 0.0
    %211 = vmatpush1.msra.mxu0 0.0
    %212 = vmatprep.subr.mxu0 0.0
    %213 = vmatpush1.msra.mxu0 0.0
    %214 = vmatprep.subr.mxu0 0.0
    %215 = vmatpush1.msra.mxu0 0.0
    %216 = vmatprep.subr.mxu0 0.0
    %217 = vmatpush1.msra.mxu0 0.0
    %218 = vmatprep.subr.mxu0 0.0
    %219 = vmatpush1.msra.mxu0 0.0
    %220 = vmatprep.mubr.f32.mxu0 0.0
    %221 = vmatmul.mubr.f32.gmra.mrb[0].mxu0 %v154
    %v222 = vpop.f32.mrb[0].mxu0
    %v223 = vadd.f32 0.0, %v222
    %v224 = vpop.f32.mrb[0].mxu0
    %225 = vmatprep.mubr.f32.mxu0 0.0
    %226 = vmatmul.mubr.f32.gmra.mrb[0].mxu0 %v155
    %v227 = vpop.f32.mrb[0].mxu0
    %v228 = vadd.f32 0.0, %v227
    %v229 = vpop.f32.mrb[0].mxu0
    %230 = vdwg.mxu0
    %p231 = scmp.eq.s32.totalorder 0, 0
    // Predicated region
    $region22: #{clip_mlp.1} parent=1 // pred_check
      %p232 = pneg %p231
    $region23: #{clip_mlp.1} parent=1 // pred_check_branch
      %234 = sbr.rel (%p232) target = $region25
    $region24: #{clip_mlp.1} parent=1 // pred_region
      %235 = vst.msk [vmem:[#allocation2] sm:$0xff] %vm56, %v223
      %236 = vst.msk [vmem:[#allocation2 + $0x8] sm:$0xff] %vm56, %v228
    $region25: #{clip_mlp.1} parent=1 // pred_fallthru
      _
    %p237 = scmp.gt.s32.totalorder 0, 0
    // Predicated region
    $region26: #{clip_mlp.1} parent=1 // pred_check
      %p238 = pneg %p237
    $region27: #{clip_mlp.1} parent=1 // pred_check_branch
      %240 = sbr.rel (%p238) target = $region29
    $region28: #{clip_mlp.1} parent=1 // pred_region
      %v241 = vld [vmem:[#allocation2] sm:$0xff]
      %v242 = vld [vmem:[#allocation2 + $0x8] sm:$0xff]
      %v243 = vadd.f32 %v241, %v223
      %v244 = vadd.f32 %v242, %v228
      %245 = vst.msk [vmem:[#allocation2] sm:$0xff] %vm56, %v243
      %246 = vst.msk [vmem:[#allocation2 + $0x8] sm:$0xff] %vm56, %v244
    $region29: #{clip_mlp.1} parent=1 // pred_fallthru
      _
    // Predicated region
    $region30: #{clip_mlp.1} parent=1 // pred_check
      %p247 = pneg %p231
    $region31: #{clip_mlp.1} parent=1 // pred_check_branch
      %249 = sbr.rel (%p247) target = $region33
    $region32: #{clip_mlp.1} parent=1 // pred_region
      %v250 = vld [vmem:[#allocation2] sm:$0xff]
      %v251 = vld [vmem:[#allocation2 + $0x8] sm:$0xff]
      %v252 = vld [vmem:[%s4] sm:$0x1]
      %v254 = vlaneseq
      %v255 = vshrl.u32 %v254, 7
      %v256 = vsub.s32 0, %v255
      %v257 = vrot.slane %v252, %v256
      %v259 = vadd.f32 %v250, %v257
      %v260 = vadd.f32 %v251, %v257
      %261 = vst.msk [vmem:[#allocation3] sm:$0xff] %vm56, %v259
      %262 = vst.msk [vmem:[#allocation3 + $0x8] sm:$0xff] %vm56, %v260
    $region33: #{clip_mlp.1} parent=1 // pred_fallthru
      _
    // Predicated region
    $region34: #{clip_mlp.1} parent=1 // pred_check
      _
    $region35: #{clip_mlp.1} parent=1 // pred_check_branch
      %264 = sbr.rel (0) target = $region37
    $region36: #{clip_mlp.1} parent=1 // pred_region
      %s266 = ssub.s32 256, 256
      %267 = vsyncadd [#allocation4], %s266
      %s268 = sshll.u32 [#allocation3], 4
      %s269 = int_to_ptr.vmem [resolvable:$true] %s268
      %274 = dma.vmem_to_hbm [thread:$0]  %s269, 256, %s5, [#allocation4], 128, 128, 8
    $region37: #{clip_mlp.1} parent=1 // pred_fallthru
      _
    // Predicated region
    $region38: #{clip_mlp.1} parent=1 // pred_check
      _
    $region39: #{clip_mlp.1} parent=1 // pred_check_branch
      %276 = sbr.rel (0) target = $region41
    $region40: #{clip_mlp.1} parent=1 // pred_region
      %277 = dma.done [#allocation4], 256
    $region41: #{clip_mlp.1} parent=1 // pred_fallthru
      _
    %278 = vsyncpa [#allocation4], 1

</llo_original>
